<compile_context>
chip_gen: v6e
topology: v6e:2x2x1
jax: 0.10.0
libtpu: 0.0.40
codegen_flags: <defaults>
</compile_context>

<pallas_src>
import functools

import numpy as np
import jax
import jax.numpy as jnp
from jax.experimental import pallas as pl
from jax.experimental.pallas import tpu as pltpu


# ---------------------------------------------------------------------------
# Exact-GELU helper (erf via Abramowitz & Stegun 7.1.26, max abs err ~1.5e-7).
# The divide is pushed to the EUP (approx reciprocal + 1 Newton step) and the
# exp also lands on the EUP, keeping the VPU free for the MAC cascade.
# ---------------------------------------------------------------------------
_INV_SQRT2 = np.float32(1.0 / np.sqrt(2.0))


def _gelu_exact(x):
    z = x * _INV_SQRT2
    az = jnp.abs(z)
    sign = jnp.where(z < 0.0, jnp.float32(-1.0), jnp.float32(1.0))
    d = jnp.float32(1.0) + jnp.float32(0.3275911) * az
    r = pl.reciprocal(d, approx=True)
    r = r * (jnp.float32(2.0) - d * r)          # one Newton step -> near-exact 1/d
    t = r
    poly = ((((jnp.float32(1.061405429) * t + jnp.float32(-1.453152027)) * t
              + jnp.float32(1.421413741)) * t + jnp.float32(-0.284496736)) * t
            + jnp.float32(0.254829592)) * t
    erf = sign * (jnp.float32(1.0) - poly * jnp.exp(-az * az))
    return jnp.float32(0.5) * x * (jnp.float32(1.0) + erf)


# ---------------------------------------------------------------------------
# Pallas kernel: one (channel-tile, batch) per grid step.
# ---------------------------------------------------------------------------
def _multires_kernel(x_ref, h0_ref, ty_ref, o_ref, *, depth, ksize):
    x = x_ref[0].astype(jnp.float32)            # (TC_C, L) f32 accumulation
    h0 = h0_ref[...].astype(jnp.float32)        # (TC_C, K) low-pass taps
    ty = ty_ref[...].astype(jnp.float32)        # (depth, TC_C, K) folded y-taps

    Ct, L = x.shape
    # Hoisted once: lane index for causal masking of the rolled operands.
    lane = jax.lax.broadcasted_iota(jnp.int32, (Ct, L), dimension=1)
    zero = jnp.zeros_like(x)

    rlow = x
    y = jnp.zeros_like(x)
    dilation = 1
    for lvl in range(depth):                    # lvl=0 <-> i=depth, ..., lvl=depth-1 <-> i=1
        last = (lvl == depth - 1)
        taps_y = ty[lvl]                        # (TC_C, K), all mixing weights pre-folded
        rlow_new = None if last else jnp.zeros_like(rlow)
        for j in range(ksize):
            s = dilation * j                    # static shift
            if s == 0:
                shifted = rlow                  # v[t]
            else:
                # v[t - s] with zeros for t < s: lane roll on the XLU + VPU select,
                # no VMEM store/reload and no non-128-aligned reads.
                shifted = jnp.where(lane >= s,
                                    pltpu.roll(rlow, shift=s, axis=1),
                                    zero)
            k = ksize - 1 - j
            y = y + taps_y[:, k:k + 1] * shifted             # accumulate into y directly
            if not last:                                     # last level needs no low-pass
                rlow_new = rlow_new + h0[:, k:k + 1] * shifted
        if not last:
            rlow = rlow_new
        dilation *= 2

    # TODO(synk): dropout omitted — module default dropout=0.0 (identity in eval mode).
    o_ref[0] = _gelu_exact(y).astype(o_ref.dtype)


# ---------------------------------------------------------------------------
# Wrapper
# ---------------------------------------------------------------------------
def _fold_taps(h0, h1, w, depth, K):
    """Fold all mixing weights w into per-level y-taps (depth, C, K)."""
    # Level lvl uses mixing weight w[:, depth - lvl] on its high-pass output.
    taps = [w[:, depth - lvl][:, None] * h1 for lvl in range(depth)]
    # w[:, 0] * residual_low_final shares shifts with the last level's high-pass,
    # so merge the scaled low-pass taps into the last level's y-taps.
    taps[depth - 1] = taps[depth - 1] + w[:, 0][:, None] * h0
    # x * w[:, -1]: level 0's shift-0 term (tap index K-1) reads x directly.
    taps[0] = taps[0].at[:, K - 1].add(w[:, -1])
    return jnp.stack(taps, axis=0).astype(jnp.float32)       # (depth, C, K)


def _pick_channel_tile(C, L, itemsize, max_block_bytes=2 << 20):
    """Largest multiple-of-8 divisor of C whose (tile, L) block stays small."""
    if C % 8 != 0:
        return C                                 # full-extent block is always legal
    tc = 8
    for cand in range(16, C + 1, 8):
        if C % cand == 0 and cand * L * itemsize <= max_block_bytes:
            tc = cand
    return tc


def causal_multires_conv1d(x, h0, h1, w, *, channel_tile=None, interpret=False):
    B, C, L = x.shape
    h0 = h0.reshape(C, -1).astype(jnp.float32)
    h1 = h1.reshape(C, -1).astype(jnp.float32)
    w = w.astype(jnp.float32)
    K = h0.shape[-1]
    depth = w.shape[-1] - 2
    assert depth >= 1, "depth must be >= 1"

    taps_y = _fold_taps(h0, h1, w, depth, K)     # (depth, C, K)

    itemsize = jnp.dtype(x.dtype).itemsize
    tc = _pick_channel_tile(C, L, itemsize) if channel_tile is None else channel_tile
    assert C % tc == 0, (C, tc)

    kernel = functools.partial(_multires_kernel, depth=depth, ksize=K)

    # Per-step VMEM: double-buffered x/y blocks + a few live f32 temporaries.
    # Re-derived conservatively for v7x's 64 MiB VMEM (no scratch buffer).
    block_bytes = tc * L * 4
    vmem_limit = int(min(64 << 20, max(16 << 20, 16 * block_bytes)))
    # TODO(synk): for very long L, add an L grid axis with a left halo of
    # (K-1)*(2**depth - 1) lanes and recompute the overlap.

    return pl.pallas_call(
        kernel,
        out_shape=jax.ShapeDtypeStruct((B, C, L), x.dtype),
        grid_spec=pltpu.PrefetchScalarGridSpec(
            num_scalar_prefetch=0,
            # Batch innermost: tap blocks keep the same block index across the
            # inner loop, so Pallas skips their re-DMA; x/y stream every step.
            grid=(C // tc, B),
            in_specs=[
                pl.BlockSpec((1, tc, L), lambda c, b: (b, c, 0)),        # x
                pl.BlockSpec((tc, K), lambda c, b: (c, 0)),              # h0
                pl.BlockSpec((depth, tc, K), lambda c, b: (0, c, 0)),    # folded y-taps
            ],
            out_specs=pl.BlockSpec((1, tc, L), lambda c, b: (b, c, 0)),
        ),
        compiler_params=pltpu.CompilerParams(
            dimension_semantics=("parallel", "parallel"),
            vmem_limit_bytes=vmem_limit),
        interpret=interpret,
    )(x, h0, taps_y)


# ---------------------------------------------------------------------------
# Pure-JAX reference (mirrors the PyTorch forward exactly)
# ---------------------------------------------------------------------------
def reference(x, h0, h1, w):
    B, C, L = x.shape
    K = h0.shape[-1]
    depth = w.shape[-1] - 2

    def causal_dw_conv(v, h, d):
        padlen = d * (K - 1)
        vp = jnp.pad(v, ((0, 0), (0, 0), (padlen, 0)))
        out = jnp.zeros_like(v)
        for k in range(K):
            out = out + h[None, :, k:k + 1] * vp[:, :, d * k: d * k + L]
        return out

    rlow = x
    y = jnp.zeros_like(x)
    d = 1
    for i in range(depth, 0, -1):
        rhigh = causal_dw_conv(rlow, h1, d)
        rlow = causal_dw_conv(rlow, h0, d)
        y = y + w[None, :, i:i + 1] * rhigh
        d *= 2
    y = y + w[None, :, 0:1] * rlow
    y = y + x * w[None, :, -1:]
    return jax.nn.gelu(y, approximate=False)


if __name__ == "__main__":
    B, C, L = 2, 8, 256          # batch, channels, sequence length
    K, DEPTH = 4, 3              # kernel_size, depth

    key = jax.random.PRNGKey(0)
    k1, k2, k3, k4 = jax.random.split(key, 4)

    scalar = np.sqrt(2.0) / (K * 2)
    h0 = (jax.random.uniform(k1, (C, K), minval=-1.0, maxval=1.0)
          * scalar).astype(jnp.float32)
    h1 = (jax.random.uniform(k2, (C, K), minval=-1.0, maxval=1.0)
          * scalar).astype(jnp.float32)
    w = (jax.random.uniform(k3, (C, DEPTH + 2), minval=-1.0, maxval=1.0)
         * np.sqrt(2.0 / (2 * DEPTH + 4))).astype(jnp.float32)
    x = jax.random.normal(k4, (B, C, L), dtype=jnp.float32)

    out = causal_multires_conv1d(x, h0, h1, w)
    out = jax.block_until_ready(out)

    ref = reference(x, h0, h1, w)
    np.testing.assert_allclose(np.asarray(out), np.asarray(ref),
                               rtol=2e-4, atol=2e-5)
    print("KERNEL_OK")
</pallas_src>

<mosaic_0001>
module attributes {stable_mosaic.version = 11 : i64} {
  func.func @_multires_kernel(%arg0: i32, %arg1: i32, %arg2: memref<1x8x256xf32, #tpu.memory_space<vmem>>, %arg3: memref<8x4xf32, #tpu.memory_space<vmem>>, %arg4: memref<3x8x4xf32, #tpu.memory_space<vmem>>, %arg5: memref<1x8x256xf32, #tpu.memory_space<vmem>>) attributes {dimension_semantics = [#tpu.dimension_semantics<parallel>, #tpu.dimension_semantics<parallel>], iteration_bounds = array<i64: 1, 2>, scalar_prefetch = 0 : i64, scratch_operands = 0 : i64, tpu.core_type = #tpu.core_type<tc>, window_params = [{transform_indices = @transform_0, window_bounds = array<i64: 1, 8, 256>}, {transform_indices = @transform_1, window_bounds = array<i64: 8, 4>}, {transform_indices = @transform_2, window_bounds = array<i64: 3, 8, 4>}, {transform_indices = @transform_3, window_bounds = array<i64: 1, 8, 256>}]} {
    %c0 = arith.constant 0 : index
    %c0_0 = arith.constant 0 : index
    %c0_1 = arith.constant 0 : index
    %0 = vector.load %arg2[%c0, %c0_0, %c0_1] : memref<1x8x256xf32, #tpu.memory_space<vmem>>, vector<1x8x256xf32>
    %1 = vector.shape_cast %0 : vector<1x8x256xf32> to vector<8x256xf32>
    %c0_2 = arith.constant 0 : index
    %c0_3 = arith.constant 0 : index
    %2 = vector.load %arg3[%c0_2, %c0_3] : memref<8x4xf32, #tpu.memory_space<vmem>>, vector<8x4xf32>
    %c0_4 = arith.constant 0 : index
    %c0_5 = arith.constant 0 : index
    %c0_6 = arith.constant 0 : index
    %3 = vector.load %arg4[%c0_4, %c0_5, %c0_6] : memref<3x8x4xf32, #tpu.memory_space<vmem>>, vector<3x8x4xf32>
    %4 = tpu.iota {dimensions = array<i32: 1>} : vector<8x256xi32>
    %cst = arith.constant 0.000000e+00 : f32
    %5 = vector.broadcast %cst : f32 to vector<8x256xf32>
    %cst_7 = arith.constant 0.000000e+00 : f32
    %6 = vector.broadcast %cst_7 : f32 to vector<8x256xf32>
    %7 = vector.extract_strided_slice %3 {offsets = [0, 0, 0], sizes = [1, 8, 4], strides = [1, 1, 1]} : vector<3x8x4xf32> to vector<1x8x4xf32>
    %8 = vector.shape_cast %7 : vector<1x8x4xf32> to vector<8x4xf32>
    %cst_8 = arith.constant 0.000000e+00 : f32
    %9 = vector.broadcast %cst_8 : f32 to vector<8x256xf32>
    %10 = vector.extract_strided_slice %8 {offsets = [0, 3], sizes = [8, 1], strides = [1, 1]} : vector<8x4xf32> to vector<8x1xf32>
    %11 = vector.broadcast %10 : vector<8x1xf32> to vector<8x256xf32>
    %12 = arith.mulf %11, %1 : vector<8x256xf32>
    %13 = arith.addf %6, %12 : vector<8x256xf32>
    %14 = vector.extract_strided_slice %2 {offsets = [0, 3], sizes = [8, 1], strides = [1, 1]} : vector<8x4xf32> to vector<8x1xf32>
    %15 = vector.broadcast %14 : vector<8x1xf32> to vector<8x256xf32>
    %16 = arith.mulf %15, %1 : vector<8x256xf32>
    %17 = arith.addf %9, %16 : vector<8x256xf32>
    %c1_i32 = arith.constant 1 : i32
    %18 = vector.broadcast %c1_i32 : i32 to vector<8x256xi32>
    %19 = arith.cmpi sge, %4, %18 : vector<8x256xi32>
    %c1_i32_9 = arith.constant 1 : i32
    %20 = tpu.dynamic_rotate %1 by %c1_i32_9 dim 1 : vector<8x256xf32>, i32 -> vector<8x256xf32>
    %21 = arith.select %19, %20, %5 : vector<8x256xi1>, vector<8x256xf32>
    %22 = vector.extract_strided_slice %8 {offsets = [0, 2], sizes = [8, 1], strides = [1, 1]} : vector<8x4xf32> to vector<8x1xf32>
    %23 = vector.broadcast %22 : vector<8x1xf32> to vector<8x256xf32>
    %24 = arith.mulf %23, %21 : vector<8x256xf32>
    %25 = arith.addf %13, %24 : vector<8x256xf32>
    %26 = vector.extract_strided_slice %2 {offsets = [0, 2], sizes = [8, 1], strides = [1, 1]} : vector<8x4xf32> to vector<8x1xf32>
    %27 = vector.broadcast %26 : vector<8x1xf32> to vector<8x256xf32>
    %28 = arith.mulf %27, %21 : vector<8x256xf32>
    %29 = arith.addf %17, %28 : vector<8x256xf32>
    %c2_i32 = arith.constant 2 : i32
    %30 = vector.broadcast %c2_i32 : i32 to vector<8x256xi32>
    %31 = arith.cmpi sge, %4, %30 : vector<8x256xi32>
    %c2_i32_10 = arith.constant 2 : i32
    %32 = tpu.dynamic_rotate %1 by %c2_i32_10 dim 1 : vector<8x256xf32>, i32 -> vector<8x256xf32>
    %33 = arith.select %31, %32, %5 : vector<8x256xi1>, vector<8x256xf32>
    %34 = vector.extract_strided_slice %8 {offsets = [0, 1], sizes = [8, 1], strides = [1, 1]} : vector<8x4xf32> to vector<8x1xf32>
    %35 = vector.broadcast %34 : vector<8x1xf32> to vector<8x256xf32>
    %36 = arith.mulf %35, %33 : vector<8x256xf32>
    %37 = arith.addf %25, %36 : vector<8x256xf32>
    %38 = vector.extract_strided_slice %2 {offsets = [0, 1], sizes = [8, 1], strides = [1, 1]} : vector<8x4xf32> to vector<8x1xf32>
    %39 = vector.broadcast %38 : vector<8x1xf32> to vector<8x256xf32>
    %40 = arith.mulf %39, %33 : vector<8x256xf32>
    %41 = arith.addf %29, %40 : vector<8x256xf32>
    %c3_i32 = arith.constant 3 : i32
    %42 = vector.broadcast %c3_i32 : i32 to vector<8x256xi32>
    %43 = arith.cmpi sge, %4, %42 : vector<8x256xi32>
    %c3_i32_11 = arith.constant 3 : i32
    %44 = tpu.dynamic_rotate %1 by %c3_i32_11 dim 1 : vector<8x256xf32>, i32 -> vector<8x256xf32>
    %45 = arith.select %43, %44, %5 : vector<8x256xi1>, vector<8x256xf32>
    %46 = vector.extract_strided_slice %8 {offsets = [0, 0], sizes = [8, 1], strides = [1, 1]} : vector<8x4xf32> to vector<8x1xf32>
    %47 = vector.broadcast %46 : vector<8x1xf32> to vector<8x256xf32>
    %48 = arith.mulf %47, %45 : vector<8x256xf32>
    %49 = arith.addf %37, %48 : vector<8x256xf32>
    %50 = vector.extract_strided_slice %2 {offsets = [0, 0], sizes = [8, 1], strides = [1, 1]} : vector<8x4xf32> to vector<8x1xf32>
    %51 = vector.broadcast %50 : vector<8x1xf32> to vector<8x256xf32>
    %52 = arith.mulf %51, %45 : vector<8x256xf32>
    %53 = arith.addf %41, %52 : vector<8x256xf32>
    %54 = vector.extract_strided_slice %3 {offsets = [1, 0, 0], sizes = [1, 8, 4], strides = [1, 1, 1]} : vector<3x8x4xf32> to vector<1x8x4xf32>
    %55 = vector.shape_cast %54 : vector<1x8x4xf32> to vector<8x4xf32>
    %cst_12 = arith.constant 0.000000e+00 : f32
    %56 = vector.broadcast %cst_12 : f32 to vector<8x256xf32>
    %57 = vector.extract_strided_slice %55 {offsets = [0, 3], sizes = [8, 1], strides = [1, 1]} : vector<8x4xf32> to vector<8x1xf32>
    %58 = vector.broadcast %57 : vector<8x1xf32> to vector<8x256xf32>
    %59 = arith.mulf %58, %53 : vector<8x256xf32>
    %60 = arith.addf %49, %59 : vector<8x256xf32>
    %61 = vector.extract_strided_slice %2 {offsets = [0, 3], sizes = [8, 1], strides = [1, 1]} : vector<8x4xf32> to vector<8x1xf32>
    %62 = vector.broadcast %61 : vector<8x1xf32> to vector<8x256xf32>
    %63 = arith.mulf %62, %53 : vector<8x256xf32>
    %64 = arith.addf %56, %63 : vector<8x256xf32>
    %c2_i32_13 = arith.constant 2 : i32
    %65 = vector.broadcast %c2_i32_13 : i32 to vector<8x256xi32>
    %66 = arith.cmpi sge, %4, %65 : vector<8x256xi32>
    %c2_i32_14 = arith.constant 2 : i32
    %67 = tpu.dynamic_rotate %53 by %c2_i32_14 dim 1 : vector<8x256xf32>, i32 -> vector<8x256xf32>
    %68 = arith.select %66, %67, %5 : vector<8x256xi1>, vector<8x256xf32>
    %69 = vector.extract_strided_slice %55 {offsets = [0, 2], sizes = [8, 1], strides = [1, 1]} : vector<8x4xf32> to vector<8x1xf32>
    %70 = vector.broadcast %69 : vector<8x1xf32> to vector<8x256xf32>
    %71 = arith.mulf %70, %68 : vector<8x256xf32>
    %72 = arith.addf %60, %71 : vector<8x256xf32>
    %73 = vector.extract_strided_slice %2 {offsets = [0, 2], sizes = [8, 1], strides = [1, 1]} : vector<8x4xf32> to vector<8x1xf32>
    %74 = vector.broadcast %73 : vector<8x1xf32> to vector<8x256xf32>
    %75 = arith.mulf %74, %68 : vector<8x256xf32>
    %76 = arith.addf %64, %75 : vector<8x256xf32>
    %c4_i32 = arith.constant 4 : i32
    %77 = vector.broadcast %c4_i32 : i32 to vector<8x256xi32>
    %78 = arith.cmpi sge, %4, %77 : vector<8x256xi32>
    %c4_i32_15 = arith.constant 4 : i32
    %79 = tpu.dynamic_rotate %53 by %c4_i32_15 dim 1 : vector<8x256xf32>, i32 -> vector<8x256xf32>
    %80 = arith.select %78, %79, %5 : vector<8x256xi1>, vector<8x256xf32>
    %81 = vector.extract_strided_slice %55 {offsets = [0, 1], sizes = [8, 1], strides = [1, 1]} : vector<8x4xf32> to vector<8x1xf32>
    %82 = vector.broadcast %81 : vector<8x1xf32> to vector<8x256xf32>
    %83 = arith.mulf %82, %80 : vector<8x256xf32>
    %84 = arith.addf %72, %83 : vector<8x256xf32>
    %85 = vector.extract_strided_slice %2 {offsets = [0, 1], sizes = [8, 1], strides = [1, 1]} : vector<8x4xf32> to vector<8x1xf32>
    %86 = vector.broadcast %85 : vector<8x1xf32> to vector<8x256xf32>
    %87 = arith.mulf %86, %80 : vector<8x256xf32>
    %88 = arith.addf %76, %87 : vector<8x256xf32>
    %c6_i32 = arith.constant 6 : i32
    %89 = vector.broadcast %c6_i32 : i32 to vector<8x256xi32>
    %90 = arith.cmpi sge, %4, %89 : vector<8x256xi32>
    %c6_i32_16 = arith.constant 6 : i32
    %91 = tpu.dynamic_rotate %53 by %c6_i32_16 dim 1 : vector<8x256xf32>, i32 -> vector<8x256xf32>
    %92 = arith.select %90, %91, %5 : vector<8x256xi1>, vector<8x256xf32>
    %93 = vector.extract_strided_slice %55 {offsets = [0, 0], sizes = [8, 1], strides = [1, 1]} : vector<8x4xf32> to vector<8x1xf32>
    %94 = vector.broadcast %93 : vector<8x1xf32> to vector<8x256xf32>
    %95 = arith.mulf %94, %92 : vector<8x256xf32>
    %96 = arith.addf %84, %95 : vector<8x256xf32>
    %97 = vector.extract_strided_slice %2 {offsets = [0, 0], sizes = [8, 1], strides = [1, 1]} : vector<8x4xf32> to vector<8x1xf32>
    %98 = vector.broadcast %97 : vector<8x1xf32> to vector<8x256xf32>
    %99 = arith.mulf %98, %92 : vector<8x256xf32>
    %100 = arith.addf %88, %99 : vector<8x256xf32>
    %101 = vector.extract_strided_slice %3 {offsets = [2, 0, 0], sizes = [1, 8, 4], strides = [1, 1, 1]} : vector<3x8x4xf32> to vector<1x8x4xf32>
    %102 = vector.shape_cast %101 : vector<1x8x4xf32> to vector<8x4xf32>
    %103 = vector.extract_strided_slice %102 {offsets = [0, 3], sizes = [8, 1], strides = [1, 1]} : vector<8x4xf32> to vector<8x1xf32>
    %104 = vector.broadcast %103 : vector<8x1xf32> to vector<8x256xf32>
    %105 = arith.mulf %104, %100 : vector<8x256xf32>
    %106 = arith.addf %96, %105 : vector<8x256xf32>
    %c4_i32_17 = arith.constant 4 : i32
    %107 = vector.broadcast %c4_i32_17 : i32 to vector<8x256xi32>
    %108 = arith.cmpi sge, %4, %107 : vector<8x256xi32>
    %c4_i32_18 = arith.constant 4 : i32
    %109 = tpu.dynamic_rotate %100 by %c4_i32_18 dim 1 : vector<8x256xf32>, i32 -> vector<8x256xf32>
    %110 = arith.select %108, %109, %5 : vector<8x256xi1>, vector<8x256xf32>
    %111 = vector.extract_strided_slice %102 {offsets = [0, 2], sizes = [8, 1], strides = [1, 1]} : vector<8x4xf32> to vector<8x1xf32>
    %112 = vector.broadcast %111 : vector<8x1xf32> to vector<8x256xf32>
    %113 = arith.mulf %112, %110 : vector<8x256xf32>
    %114 = arith.addf %106, %113 : vector<8x256xf32>
    %c8_i32 = arith.constant 8 : i32
    %115 = vector.broadcast %c8_i32 : i32 to vector<8x256xi32>
    %116 = arith.cmpi sge, %4, %115 : vector<8x256xi32>
    %c8_i32_19 = arith.constant 8 : i32
    %117 = tpu.dynamic_rotate %100 by %c8_i32_19 dim 1 : vector<8x256xf32>, i32 -> vector<8x256xf32>
    %118 = arith.select %116, %117, %5 : vector<8x256xi1>, vector<8x256xf32>
    %119 = vector.extract_strided_slice %102 {offsets = [0, 1], sizes = [8, 1], strides = [1, 1]} : vector<8x4xf32> to vector<8x1xf32>
    %120 = vector.broadcast %119 : vector<8x1xf32> to vector<8x256xf32>
    %121 = arith.mulf %120, %118 : vector<8x256xf32>
    %122 = arith.addf %114, %121 : vector<8x256xf32>
    %c12_i32 = arith.constant 12 : i32
    %123 = vector.broadcast %c12_i32 : i32 to vector<8x256xi32>
    %124 = arith.cmpi sge, %4, %123 : vector<8x256xi32>
    %c12_i32_20 = arith.constant 12 : i32
    %125 = tpu.dynamic_rotate %100 by %c12_i32_20 dim 1 : vector<8x256xf32>, i32 -> vector<8x256xf32>
    %126 = arith.select %124, %125, %5 : vector<8x256xi1>, vector<8x256xf32>
    %127 = vector.extract_strided_slice %102 {offsets = [0, 0], sizes = [8, 1], strides = [1, 1]} : vector<8x4xf32> to vector<8x1xf32>
    %128 = vector.broadcast %127 : vector<8x1xf32> to vector<8x256xf32>
    %129 = arith.mulf %128, %126 : vector<8x256xf32>
    %130 = arith.addf %122, %129 : vector<8x256xf32>
    %cst_21 = arith.constant 0.707106769 : f32
    %131 = vector.broadcast %cst_21 : f32 to vector<8x256xf32>
    %132 = arith.mulf %130, %131 : vector<8x256xf32>
    %133 = math.absf %132 : vector<8x256xf32>
    %cst_22 = arith.constant 0.000000e+00 : f32
    %134 = vector.broadcast %cst_22 : f32 to vector<8x256xf32>
    %135 = arith.cmpf olt, %132, %134 : vector<8x256xf32>
    %cst_23 = arith.constant -1.000000e+00 : f32
    %cst_24 = arith.constant 1.000000e+00 : f32
    %136 = vector.broadcast %cst_23 : f32 to vector<8x256xf32>
    %137 = vector.broadcast %cst_24 : f32 to vector<8x256xf32>
    %138 = arith.select %135, %136, %137 : vector<8x256xi1>, vector<8x256xf32>
    %cst_25 = arith.constant 0.327591091 : f32
    %139 = vector.broadcast %cst_25 : f32 to vector<8x256xf32>
    %140 = arith.mulf %139, %133 : vector<8x256xf32>
    %cst_26 = arith.constant 1.000000e+00 : f32
    %141 = vector.broadcast %cst_26 : f32 to vector<8x256xf32>
    %142 = arith.addf %141, %140 : vector<8x256xf32>
    %143 = tpu.reciprocal %142 {approx = true} : vector<8x256xf32> -> vector<8x256xf32>
    %144 = arith.mulf %142, %143 : vector<8x256xf32>
    %cst_27 = arith.constant 2.000000e+00 : f32
    %145 = vector.broadcast %cst_27 : f32 to vector<8x256xf32>
    %146 = arith.subf %145, %144 : vector<8x256xf32>
    %147 = arith.mulf %143, %146 : vector<8x256xf32>
    %cst_28 = arith.constant 1.06140542 : f32
    %148 = vector.broadcast %cst_28 : f32 to vector<8x256xf32>
    %149 = arith.mulf %148, %147 : vector<8x256xf32>
    %cst_29 = arith.constant -1.45315206 : f32
    %150 = vector.broadcast %cst_29 : f32 to vector<8x256xf32>
    %151 = arith.addf %149, %150 : vector<8x256xf32>
    %152 = arith.mulf %151, %147 : vector<8x256xf32>
    %cst_30 = arith.constant 1.42141378 : f32
    %153 = vector.broadcast %cst_30 : f32 to vector<8x256xf32>
    %154 = arith.addf %152, %153 : vector<8x256xf32>
    %155 = arith.mulf %154, %147 : vector<8x256xf32>
    %cst_31 = arith.constant -0.284496725 : f32
    %156 = vector.broadcast %cst_31 : f32 to vector<8x256xf32>
    %157 = arith.addf %155, %156 : vector<8x256xf32>
    %158 = arith.mulf %157, %147 : vector<8x256xf32>
    %cst_32 = arith.constant 0.254829586 : f32
    %159 = vector.broadcast %cst_32 : f32 to vector<8x256xf32>
    %160 = arith.addf %158, %159 : vector<8x256xf32>
    %161 = arith.mulf %160, %147 : vector<8x256xf32>
    %cst_33 = arith.constant 0.000000e+00 : f32
    %162 = vector.broadcast %cst_33 : f32 to vector<8x256xf32>
    %163 = arith.subf %162, %133 : vector<8x256xf32>
    %164 = arith.mulf %163, %133 : vector<8x256xf32>
    %165 = math.exp %164 : vector<8x256xf32>
    %166 = arith.mulf %161, %165 : vector<8x256xf32>
    %cst_34 = arith.constant 1.000000e+00 : f32
    %167 = vector.broadcast %cst_34 : f32 to vector<8x256xf32>
    %168 = arith.subf %167, %166 : vector<8x256xf32>
    %169 = arith.mulf %138, %168 : vector<8x256xf32>
    %cst_35 = arith.constant 5.000000e-01 : f32
    %170 = vector.broadcast %cst_35 : f32 to vector<8x256xf32>
    %171 = arith.mulf %170, %130 : vector<8x256xf32>
    %cst_36 = arith.constant 1.000000e+00 : f32
    %172 = vector.broadcast %cst_36 : f32 to vector<8x256xf32>
    %173 = arith.addf %172, %169 : vector<8x256xf32>
    %174 = arith.mulf %171, %173 : vector<8x256xf32>
    %c0_37 = arith.constant 0 : index
    %c0_38 = arith.constant 0 : index
    %c0_39 = arith.constant 0 : index
    %175 = vector.load %arg5[%c0_37, %c0_38, %c0_39] : memref<1x8x256xf32, #tpu.memory_space<vmem>>, vector<1x8x256xf32>
    %176 = vector.shape_cast %175 : vector<1x8x256xf32> to vector<8x256xf32>
    %177 = vector.shape_cast %174 : vector<8x256xf32> to vector<1x8x256xf32>
    tpu.vector_store %arg5[%c0_37, %c0_38, %c0_39], %177 {strides = array<i32>} : memref<1x8x256xf32, #tpu.memory_space<vmem>>, vector<1x8x256xf32>,
    return
  }
  func.func @transform_0(%arg0: i32, %arg1: i32) -> (i32, i32, i32) {
    %c0_i32 = arith.constant 0 : i32
    %c0_i32_0 = arith.constant 0 : i32
    return %arg1, %arg0, %c0_i32 : i32, i32, i32
  }
  func.func @transform_1(%arg0: i32, %arg1: i32) -> (i32, i32) {
    %c0_i32 = arith.constant 0 : i32
    %c0_i32_0 = arith.constant 0 : i32
    return %arg0, %c0_i32 : i32, i32
  }
  func.func @transform_2(%arg0: i32, %arg1: i32) -> (i32, i32, i32) {
    %c0_i32 = arith.constant 0 : i32
    %c0_i32_0 = arith.constant 0 : i32
    %c0_i32_1 = arith.constant 0 : i32
    return %c0_i32, %arg0, %c0_i32_0 : i32, i32, i32
  }
  func.func @transform_3(%arg0: i32, %arg1: i32) -> (i32, i32, i32) {
    %c0_i32 = arith.constant 0 : i32
    %c0_i32_0 = arith.constant 0 : i32
    return %arg1, %arg0, %c0_i32 : i32, i32, i32
  }
}

</mosaic_0001>

<llo_original>
// kernel: tpu_custom_call.1
$region0: #{tpu_custom_call.1}
  #allocation0 [shape = 'u32[]', space=smem, size = 0x4, offset = 0x4, fixed_abs, tag = 'smem constant byte address 0x4 - core index']
  #allocation1 [shape = 'u32[144,128]{1,0:T(1,128)}', space=vmem, size = 0x12000, scoped, tag = 'internal scratch']
  %s0 = inlined_call_operand.vmem [shape: f32[2,8,256], index: 0, kind: input, shape index: {}]
  %s1 = inlined_call_operand.vmem [shape: f32[8,4], index: 1, kind: input, shape index: {}]
  %s2 = inlined_call_operand.vmem [shape: f32[3,8,4], index: 2, kind: input, shape index: {}]
  %s3 = inlined_call_operand.hbm [shape: f32[2,8,256], index: 3, kind: output, shape index: {}]
  %s4 = sld [smem:[#allocation0]]
  $region45: #{tpu_custom_call.1} parent=0
    _
  %s6 = ssub.s32 1, %s4
  %s7 = scalar_select 0, %s6, %s4
  $region1: #{tpu_custom_call.1} parent=0
    #allocation2 [shape = 'u8[16384]{0}', space=vmem, size = 0x4000, scoped, tag = 'output window, operand 0']
    #allocation3 [shape = 's32[2]{0}', space=sflag, size = 0x8, scoped, tag = 'scoped memory for tpu_custom_call.1']
    %8 = vsyncpa [#allocation3], 0
    %s9 = scalar_lea.sflag [#allocation3], 1
    %10 = vsyncpa %s9, 0
    loop: start=0, step=1, limit=4
    $region2: #{tpu_custom_call.1} parent=1 // loop_pre_header
      _
    $region3: #{tpu_custom_call.1} parent=1 // loop_header
      %s12 = sphi 0, %s16
      %p13 = scmp.ge.s32.totalorder %s12, 4
      %s19 = sphi 0, %s31
      %s20 = sphi 0, %s27
      %s21 = sphi 0, %s19
      %s22 = sphi 0, %s20
      %s23 = sphi 0, %s21
      %s24 = sphi 0, %s22
      %s36 = sphi 0, %s38
      %s39 = sphi 0, %s36
      %s40 = sphi 0, %s39
      %s56 = sphi 0, %s40
      %s62 = sphi 0, %s64
      %s65 = sphi 0, %s62
      %s66 = sphi 0, %s65
      %s82 = sphi 0, %s66
      %s88 = sphi 0, %s90
      %s91 = sphi 0, %s88
      %s92 = sphi 0, %s91
      %s108 = sphi 0, %s92
      %s116 = sphi 0, %s118
      %s119 = sphi 0, %s116
      %s120 = sphi 0, %s119
      %s136 = sphi 0, %s120
    $region4: #{tpu_custom_call.1} parent=1 // loop_header_branch
      %15 = sbr.rel (%p13) target = $region8
    $region5: #{tpu_custom_call.1} parent=1 // loop_body
      %s17 = ssub.s32 %s12, 1
      %s18 = ssub.s32 %s12, 2
      %s25 = sadd.s32 1, %s20
      %p26 = scmp.ge.s32.totalorder %s25, 2
      %s27 = scalar_select %p26, 0, %s25
      %s28 = sadd.s32 1, %s19
      %s29 = scalar_select %p26, %s28, %s19
      %p30 = scmp.ge.s32.totalorder %s29, 1
      %s31 = scalar_select %p30, 0, %s29
      %s32 = ssub.s32 %s20, %s27
      %s33 = ssub.s32 %s19, %s31
      %s34 = sor.u32 %s32, %s33
      %p35 = scmp.eq.s32.totalorder %s34, 0
      %s37 = sadd.s32 %s36, 1
      %s38 = scalar_select %p35, %s36, %s37
      %p41 = pneg %p35
      %p42 = scmp.eq.s32.totalorder %s12, 1
      %p43 = por %p41, %p42
      %p44 = scmp.ne.s32.totalorder %s36, %s39
      %p45 = scmp.eq.s32.totalorder %s12, 0
      %p46 = por %p44, %p45
      %p47 = scmp.ne.s32.totalorder %s36, %s39
      %p48 = scmp.eq.s32.totalorder %s17, 1
      %p49 = por %p47, %p48
      %p50 = scmp.ne.s32.totalorder %s39, %s40
      %p51 = scmp.eq.s32.totalorder %s17, 0
      %p52 = por %p50, %p51
      %p53 = scmp.ne.s32.totalorder %s39, %s40
      %p54 = scmp.eq.s32.totalorder %s18, 1
      %p55 = por %p53, %p54
      %p57 = scmp.ne.s32.totalorder %s40, %s56
      %p58 = scmp.eq.s32.totalorder %s18, 0
      %p59 = por %p57, %p58
      %s60 = ssub.s32 %s19, %s31
      %p61 = scmp.eq.s32.totalorder %s60, 0
      %s63 = sadd.s32 %s62, 1
      %s64 = scalar_select %p61, %s62, %s63
      %p67 = pneg %p61
      %p68 = scmp.eq.s32.totalorder %s12, 1
      %p69 = por %p67, %p68
      %p70 = scmp.ne.s32.totalorder %s62, %s65
      %p71 = scmp.eq.s32.totalorder %s12, 0
      %p72 = por %p70, %p71
      %p73 = scmp.ne.s32.totalorder %s62, %s65
      %p74 = scmp.eq.s32.totalorder %s17, 1
      %p75 = por %p73, %p74
      %p76 = scmp.ne.s32.totalorder %s65, %s66
      %p77 = scmp.eq.s32.totalorder %s17, 0
      %p78 = por %p76, %p77
      %p79 = scmp.ne.s32.totalorder %s65, %s66
      %p80 = scmp.eq.s32.totalorder %s18, 1
      %p81 = por %p79, %p80
      %p83 = scmp.ne.s32.totalorder %s66, %s82
      %p84 = scmp.eq.s32.totalorder %s18, 0
      %p85 = por %p83, %p84
      %s86 = ssub.s32 %s19, %s31
      %p87 = scmp.eq.s32.totalorder %s86, 0
      %s89 = sadd.s32 %s88, 1
      %s90 = scalar_select %p87, %s88, %s89
      %p93 = pneg %p87
      %p94 = scmp.eq.s32.totalorder %s12, 1
      %p95 = por %p93, %p94
      %p96 = scmp.ne.s32.totalorder %s88, %s91
      %p97 = scmp.eq.s32.totalorder %s12, 0
      %p98 = por %p96, %p97
      %p99 = scmp.ne.s32.totalorder %s88, %s91
      %p100 = scmp.eq.s32.totalorder %s17, 1
      %p101 = por %p99, %p100
      %p102 = scmp.ne.s32.totalorder %s91, %s92
      %p103 = scmp.eq.s32.totalorder %s17, 0
      %p104 = por %p102, %p103
      %p105 = scmp.ne.s32.totalorder %s91, %s92
      %p106 = scmp.eq.s32.totalorder %s18, 1
      %p107 = por %p105, %p106
      %p109 = scmp.ne.s32.totalorder %s92, %s108
      %p110 = scmp.eq.s32.totalorder %s18, 0
      %p111 = por %p109, %p110
      %s112 = ssub.s32 %s20, %s27
      %s113 = ssub.s32 %s19, %s31
      %s114 = sor.u32 %s112, %s113
      %p115 = scmp.eq.s32.totalorder %s114, 0
      %s117 = sadd.s32 %s116, 1
      %s118 = scalar_select %p115, %s116, %s117
      %p121 = pneg %p115
      %p122 = scmp.eq.s32.totalorder %s12, 1
      %p123 = por %p121, %p122
      %p124 = scmp.ne.s32.totalorder %s116, %s119
      %p125 = scmp.eq.s32.totalorder %s12, 0
      %p126 = por %p124, %p125
      %p127 = scmp.ne.s32.totalorder %s116, %s119
      %p128 = scmp.eq.s32.totalorder %s17, 1
      %p129 = por %p127, %p128
      %p130 = scmp.ne.s32.totalorder %s119, %s120
      %p131 = scmp.eq.s32.totalorder %s17, 0
      %p132 = por %p130, %p131
      %p133 = scmp.ne.s32.totalorder %s119, %s120
      %p134 = scmp.eq.s32.totalorder %s18, 1
      %p135 = por %p133, %p134
      %p137 = scmp.ne.s32.totalorder %s120, %s136
      %p138 = scmp.eq.s32.totalorder %s18, 0
      %p139 = por %p137, %p138
      %p140 = scmp.le.s32.totalorder 1, %s12
      %p141 = scmp.lt.s32.totalorder %s12, 3
      %p142 = pnand %p140, %p141
      %p143 = pneg %p142
      // Predicated region
      $region9: #{tpu_custom_call.1} parent=5 // pred_check
        _
      $region10: #{tpu_custom_call.1} parent=5 // pred_check_branch
        %145 = sbr.rel (%p142) target = $region12
      $region11: #{tpu_custom_call.1} parent=5 // pred_region
        %s146 = ssub.s32 %s12, 1
        // Predicated region
        $region13: #{tpu_custom_call.1} parent=11 // pred_check
          %p147 = pneg %p78
        $region14: #{tpu_custom_call.1} parent=11 // pred_check_branch
          %149 = sbr.rel (%p147) target = $region16
        $region15: #{tpu_custom_call.1} parent=11 // pred_region
          %p150 = scmp.lt.s32.totalorder %s21, 0
          %s151 = scalar_select %p150, %s21, 0
          %s152 = smul.addr %s151, 8
          %s153 = scalar_lea.vmem %s1, %s152
        $region16: #{tpu_custom_call.1} parent=11 // pred_fallthru
          _
        // Predicated region
        $region17: #{tpu_custom_call.1} parent=11 // pred_check
          %p154 = pneg %p104
        $region18: #{tpu_custom_call.1} parent=11 // pred_check_branch
          %156 = sbr.rel (%p154) target = $region20
        $region19: #{tpu_custom_call.1} parent=11 // pred_region
          %p157 = scmp.lt.s32.totalorder %s21, 0
          %s158 = scalar_select %p157, %s21, 0
          %s159 = smul.addr %s158, 8
          %s160 = scalar_lea.vmem %s2, %s159
        $region20: #{tpu_custom_call.1} parent=11 // pred_fallthru
          _
      $region12: #{tpu_custom_call.1} parent=5 // pred_fallthru
        _
      %p161 = scmp.lt.s32.totalorder %s12, 2
      // Predicated region
      $region21: #{tpu_custom_call.1} parent=5 // pred_check
        %p162 = pneg %p161
      $region22: #{tpu_custom_call.1} parent=5 // pred_check_branch
        %164 = sbr.rel (%p162) target = $region24
      $region23: #{tpu_custom_call.1} parent=5 // pred_region
        // Predicated region
        $region25: #{tpu_custom_call.1} parent=23 // pred_check
          %p165 = pneg %p46
        $region26: #{tpu_custom_call.1} parent=23 // pred_check_branch
          %167 = sbr.rel (%p165) target = $region28
        $region27: #{tpu_custom_call.1} parent=23 // pred_region
          %p168 = scmp.lt.s32.totalorder %s20, 1
          %s169 = scalar_select %p168, %s20, 1
          %p170 = scmp.lt.s32.totalorder %s19, 0
          %s171 = scalar_select %p170, %s19, 0
          %s172 = smul.addr %s171, 2
          %s173 = smul.addr %s169, 2
          %s174 = sadd.s32 %s172, %s173
          %s175 = smul.addr %s174, 8
          %s176 = scalar_lea.vmem %s0, %s175
        $region28: #{tpu_custom_call.1} parent=23 // pred_fallthru
          _
      $region24: #{tpu_custom_call.1} parent=5 // pred_fallthru
        _
      %p177 = scmp.le.s32.totalorder 1, %s12
      %p178 = scmp.lt.s32.totalorder %s12, 3
      %p179 = pnand %p177, %p178
      %p180 = pneg %p179
      // Predicated region
      $region29: #{tpu_custom_call.1} parent=5 // pred_check
        _
      $region30: #{tpu_custom_call.1} parent=5 // pred_check_branch
        %182 = sbr.rel (%p179) target = $region32
      $region31: #{tpu_custom_call.1} parent=5 // pred_region
        %s183 = ssub.s32 %s12, 1
        %p184 = scmp.lt.s32.totalorder %s22, 1
        %s185 = scalar_select %p184, %s22, 1
        %p186 = scmp.lt.s32.totalorder %s21, 0
        %s187 = scalar_select %p186, %s21, 0
        %s188 = smul.addr %s187, 2
        %s189 = smul.addr %s185, 2
        %s190 = sadd.s32 %s188, %s189
        %s191 = smul.addr %s190, 8
        %s192 = scalar_lea.vmem %s0, %s191
        %p193 = pneg %p52
        %p194 = pneg %p49
        %p195 = scmp.lt.s32.totalorder %s21, 0
        %s196 = scalar_select %p195, %s21, 0
        %s197 = smul.addr %s196, 8
        %s198 = scalar_lea.vmem %s1, %s197
        %p199 = pneg %p78
        %p200 = pneg %p75
        %p201 = scmp.lt.s32.totalorder %s21, 0
        %s202 = scalar_select %p201, %s21, 0
        %s203 = smul.addr %s202, 8
        %s204 = scalar_lea.vmem %s2, %s203
        %p205 = pneg %p104
        %p206 = pneg %p101
        %p207 = pneg %p132
        %p208 = pneg %p129
        %s209 = sand.u32 %s119, 1
        %s210 = scalar_lea.sflag [#allocation3], %s209
        %s211 = sand.u32 %s119, 1
        %s212 = smul.addr %s211, 16
        %s213 = scalar_lea.vmem [#allocation2], %s212
        %p214 = scmp.lt.s32.totalorder %s22, 1
        %s215 = scalar_select %p214, %s22, 1
        %p216 = scmp.lt.s32.totalorder %s21, 0
        %s217 = scalar_select %p216, %s21, 0
        %s218 = smul.addr %s217, 2
        %s219 = smul.addr %s215, 2
        %s220 = sadd.s32 %s218, %s219
        %s221 = smul.addr %s220, 8
        %s222 = scalar_lea.vmem %s0, %s221
        %p223 = scmp.lt.s32.totalorder %s21, 0
        %s224 = scalar_select %p223, %s21, 0
        %s225 = smul.addr %s224, 8
        %s226 = scalar_lea.vmem %s1, %s225
        %p227 = scmp.lt.s32.totalorder %s21, 0
        %s228 = scalar_select %p227, %s21, 0
        %s229 = smul.addr %s228, 8
        %s230 = scalar_lea.vmem %s2, %s229
        %v231 = vld [vmem:[%s222] sm:$0xff]
        %v232 = vld [vmem:[%s222 + $0x8] sm:$0xff]
        %v233 = vld [vmem:[%s226] sm:$0xff]
        %v234 = vld [vmem:[%s230] sm:$0xff]
        %v235 = vld [vmem:[%s230 + $0x8] sm:$0xff]
        %v236 = vld [vmem:[%s230 + $0x10] sm:$0xff]
        %v237 = vlaneseq
        %v238 = vand.u32 %v237, 127
        %v239 = vadd.s32 %v238, 128
        %241 = vset.pattern.permute.xlu0 3
        %242 = vperm.xlu0 %241, %v234
        %v243 = vpop.permute.xlu0 %242
        %v245 = vmul.f32 %v243, %v231
        %v246 = vmul.f32 %v243, %v232
        %v247 = vadd.f32 %v245, 0.0
        %v248 = vadd.f32 %v246, 0.0
        %250 = vset.pattern.permute.xlu0 3
        %251 = vperm.xlu0 %250, %v233
        %v252 = vpop.permute.xlu0 %251
        %v254 = vmul.f32 %v252, %v231
        %v255 = vmul.f32 %v252, %v232
        %v256 = vadd.f32 %v254, 0.0
        %v257 = vadd.f32 %v255, 0.0
        %vm258 = vcmp.ge.s32.totalorder %v238, 1
        %vm259 = vcmp.ge.s32.totalorder %v239, 1
        %260 = vrot.lane.b32.xlu0 %v231, 1
        %v261 = vpop.permute.xlu0 %260
        %262 = vrot.lane.b32.xlu0 %v232, 1
        %v263 = vpop.permute.xlu0 %262
        %vm264 = vcmp.lt.s32.totalorder %v238, 1
        %v265 = vsel %vm264, %v261, %v263
        %v266 = vsel %vm264, %v263, %v261
        %v267 = vsel %vm258, %v266, 0.0
        %v268 = vsel %vm259, %v265, 0.0
        %269 = vset.pattern.permute.xlu0 2
        %270 = vperm.xlu0 %269, %v234
        %v271 = vpop.permute.xlu0 %270
        %v273 = vmul.f32 %v271, %v267
        %v274 = vmul.f32 %v271, %v268
        %v275 = vadd.f32 %v247, %v273
        %v276 = vadd.f32 %v248, %v274
        %277 = vset.pattern.permute.xlu0 2
        %278 = vperm.xlu0 %277, %v233
        %v279 = vpop.permute.xlu0 %278
        %v281 = vmul.f32 %v279, %v267
        %v282 = vmul.f32 %v279, %v268
        %v283 = vadd.f32 %v256, %v281
        %v284 = vadd.f32 %v257, %v282
        %vm285 = vcmp.ge.s32.totalorder %v238, 2
        %vm286 = vcmp.ge.s32.totalorder %v239, 2
        %287 = vrot.lane.b32.xlu0 %v231, 2
        %v288 = vpop.permute.xlu0 %287
        %289 = vrot.lane.b32.xlu0 %v232, 2
        %v290 = vpop.permute.xlu0 %289
        %vm291 = vcmp.lt.s32.totalorder %v238, 2
        %v292 = vsel %vm291, %v288, %v290
        %v293 = vsel %vm291, %v290, %v288
        %v294 = vsel %vm285, %v293, 0.0
        %v295 = vsel %vm286, %v292, 0.0
        %296 = vset.pattern.permute.xlu0 1
        %297 = vperm.xlu0 %296, %v234
        %v298 = vpop.permute.xlu0 %297
        %v300 = vmul.f32 %v298, %v294
        %v301 = vmul.f32 %v298, %v295
        %v302 = vadd.f32 %v275, %v300
        %v303 = vadd.f32 %v276, %v301
        %304 = vset.pattern.permute.xlu0 1
        %305 = vperm.xlu0 %304, %v233
        %v306 = vpop.permute.xlu0 %305
        %v308 = vmul.f32 %v306, %v294
        %v309 = vmul.f32 %v306, %v295
        %v310 = vadd.f32 %v283, %v308
        %v311 = vadd.f32 %v284, %v309
        %vm312 = vcmp.ge.s32.totalorder %v238, 3
        %vm313 = vcmp.ge.s32.totalorder %v239, 3
        %314 = vrot.lane.b32.xlu0 %v231, 3
        %v315 = vpop.permute.xlu0 %314
        %316 = vrot.lane.b32.xlu0 %v232, 3
        %v317 = vpop.permute.xlu0 %316
        %vm318 = vcmp.lt.s32.totalorder %v238, 3
        %v319 = vsel %vm318, %v315, %v317
        %v320 = vsel %vm318, %v317, %v315
        %v321 = vsel %vm312, %v320, 0.0
        %v322 = vsel %vm313, %v319, 0.0
        %323 = vset.pattern.permute.xlu0 0
        %324 = vperm.xlu0 %323, %v234
        %v325 = vpop.permute.xlu0 %324
        %v327 = vmul.f32 %v325, %v321
        %v328 = vmul.f32 %v325, %v322
        %v329 = vadd.f32 %v302, %v327
        %v330 = vadd.f32 %v303, %v328
        %331 = vset.pattern.permute.xlu0 0
        %332 = vperm.xlu0 %331, %v233
        %v333 = vpop.permute.xlu0 %332
        %v335 = vmul.f32 %v333, %v321
        %v336 = vmul.f32 %v333, %v322
        %v337 = vadd.f32 %v310, %v335
        %v338 = vadd.f32 %v311, %v336
        %340 = vset.pattern.permute.xlu0 3
        %341 = vperm.xlu0 %340, %v235
        %v342 = vpop.permute.xlu0 %341
        %v344 = vmul.f32 %v342, %v337
        %v345 = vmul.f32 %v342, %v338
        %v346 = vadd.f32 %v329, %v344
        %v347 = vadd.f32 %v330, %v345
        %v348 = vmul.f32 %v252, %v337
        %v349 = vmul.f32 %v252, %v338
        %v350 = vadd.f32 %v348, 0.0
        %v351 = vadd.f32 %v349, 0.0
        %352 = vrot.lane.b32.xlu0 %v337, 2
        %v353 = vpop.permute.xlu0 %352
        %354 = vrot.lane.b32.xlu0 %v338, 2
        %v355 = vpop.permute.xlu0 %354
        %v356 = vsel %vm291, %v353, %v355
        %v357 = vsel %vm291, %v355, %v353
        %v358 = vsel %vm285, %v357, 0.0
        %v359 = vsel %vm286, %v356, 0.0
        %360 = vset.pattern.permute.xlu0 2
        %361 = vperm.xlu0 %360, %v235
        %v362 = vpop.permute.xlu0 %361
        %v364 = vmul.f32 %v362, %v358
        %v365 = vmul.f32 %v362, %v359
        %v366 = vadd.f32 %v346, %v364
        %v367 = vadd.f32 %v347, %v365
        %v368 = vmul.f32 %v279, %v358
        %v369 = vmul.f32 %v279, %v359
        %v370 = vadd.f32 %v350, %v368
        %v371 = vadd.f32 %v351, %v369
        %vm372 = vcmp.ge.s32.totalorder %v238, 4
        %vm373 = vcmp.ge.s32.totalorder %v239, 4
        %374 = vrot.lane.b32.xlu0 %v337, 4
        %v375 = vpop.permute.xlu0 %374
        %376 = vrot.lane.b32.xlu0 %v338, 4
        %v377 = vpop.permute.xlu0 %376
        %vm378 = vcmp.lt.s32.totalorder %v238, 4
        %v379 = vsel %vm378, %v375, %v377
        %v380 = vsel %vm378, %v377, %v375
        %v381 = vsel %vm372, %v380, 0.0
        %v382 = vsel %vm373, %v379, 0.0
        %383 = vset.pattern.permute.xlu0 1
        %384 = vperm.xlu0 %383, %v235
        %v385 = vpop.permute.xlu0 %384
        %v387 = vmul.f32 %v385, %v381
        %v388 = vmul.f32 %v385, %v382
        %v389 = vadd.f32 %v366, %v387
        %v390 = vadd.f32 %v367, %v388
        %v391 = vmul.f32 %v306, %v381
        %v392 = vmul.f32 %v306, %v382
        %v393 = vadd.f32 %v370, %v391
        %v394 = vadd.f32 %v371, %v392
        %vm395 = vcmp.ge.s32.totalorder %v238, 6
        %vm396 = vcmp.ge.s32.totalorder %v239, 6
        %397 = vrot.lane.b32.xlu0 %v337, 6
        %v398 = vpop.permute.xlu0 %397
        %399 = vrot.lane.b32.xlu0 %v338, 6
        %v400 = vpop.permute.xlu0 %399
        %vm401 = vcmp.lt.s32.totalorder %v238, 6
        %v402 = vsel %vm401, %v398, %v400
        %v403 = vsel %vm401, %v400, %v398
        %v404 = vsel %vm395, %v403, 0.0
        %v405 = vsel %vm396, %v402, 0.0
        %406 = vset.pattern.permute.xlu0 0
        %407 = vperm.xlu0 %406, %v235
        %v408 = vpop.permute.xlu0 %407
        %v410 = vmul.f32 %v408, %v404
        %v411 = vmul.f32 %v408, %v405
        %v412 = vadd.f32 %v389, %v410
        %v413 = vadd.f32 %v390, %v411
        %v414 = vmul.f32 %v333, %v404
        %v415 = vmul.f32 %v333, %v405
        %v416 = vadd.f32 %v393, %v414
        %v417 = vadd.f32 %v394, %v415
        %419 = vset.pattern.permute.xlu0 3
        %420 = vperm.xlu0 %419, %v236
        %v421 = vpop.permute.xlu0 %420
        %v423 = vmul.f32 %v421, %v416
        %v424 = vmul.f32 %v421, %v417
        %v425 = vadd.f32 %v412, %v423
        %v426 = vadd.f32 %v413, %v424
        %427 = vrot.lane.b32.xlu0 %v416, 4
        %v428 = vpop.permute.xlu0 %427
        %429 = vrot.lane.b32.xlu0 %v417, 4
        %v430 = vpop.permute.xlu0 %429
        %v431 = vsel %vm378, %v428, %v430
        %v432 = vsel %vm378, %v430, %v428
        %v433 = vsel %vm372, %v432, 0.0
        %v434 = vsel %vm373, %v431, 0.0
        %435 = vset.pattern.permute.xlu0 2
        %436 = vperm.xlu0 %435, %v236
        %v437 = vpop.permute.xlu0 %436
        %v439 = vmul.f32 %v437, %v433
        %v440 = vmul.f32 %v437, %v434
        %v441 = vadd.f32 %v425, %v439
        %v442 = vadd.f32 %v426, %v440
        %vm443 = vcmp.ge.s32.totalorder %v238, 8
        %vm444 = vcmp.ge.s32.totalorder %v239, 8
        %445 = vrot.lane.b32.xlu0 %v416, 8
        %v446 = vpop.permute.xlu0 %445
        %447 = vrot.lane.b32.xlu0 %v417, 8
        %v448 = vpop.permute.xlu0 %447
        %vm449 = vcmp.lt.s32.totalorder %v238, 8
        %v450 = vsel %vm449, %v446, %v448
        %v451 = vsel %vm449, %v448, %v446
        %v452 = vsel %vm443, %v451, 0.0
        %v453 = vsel %vm444, %v450, 0.0
        %454 = vset.pattern.permute.xlu0 1
        %455 = vperm.xlu0 %454, %v236
        %v456 = vpop.permute.xlu0 %455
        %v458 = vmul.f32 %v456, %v452
        %v459 = vmul.f32 %v456, %v453
        %v460 = vadd.f32 %v441, %v458
        %v461 = vadd.f32 %v442, %v459
        %vm462 = vcmp.ge.s32.totalorder %v238, 12
        %vm463 = vcmp.ge.s32.totalorder %v239, 12
        %464 = vrot.lane.b32.xlu0 %v416, 12
        %v465 = vpop.permute.xlu0 %464
        %466 = vrot.lane.b32.xlu0 %v417, 12
        %v467 = vpop.permute.xlu0 %466
        %vm468 = vcmp.lt.s32.totalorder %v238, 12
        %v469 = vsel %vm468, %v465, %v467
        %v470 = vsel %vm468, %v467, %v465
        %v471 = vsel %vm462, %v470, 0.0
        %v472 = vsel %vm463, %v469, 0.0
        %473 = vset.pattern.permute.xlu0 0
        %474 = vperm.xlu0 %473, %v236
        %v475 = vpop.permute.xlu0 %474
        %v477 = vmul.f32 %v475, %v471
        %v478 = vmul.f32 %v475, %v472
        %v479 = vadd.f32 %v460, %v477
        %v480 = vadd.f32 %v461, %v478
        %v481 = vmul.f32 %v479, 0.70710677
        %v482 = vmul.f32 %v480, 0.70710677
        %v483 = vand.u32 2147483647, %v481
        %v484 = vand.u32 2147483647, %v482
        %vm485 = vcmp.lt.f32.partialorder %v481, 0.0
        %vm486 = vcmp.lt.f32.partialorder %v482, 0.0
        %v487 = vsel %vm485, -1.0, 1.0
        %v488 = vsel %vm486, -1.0, 1.0
        %v489 = vmul.f32 %v483, 0.3275911
        %v490 = vmul.f32 %v484, 0.3275911
        %v491 = vadd.f32 %v489, 1.0
        %v492 = vadd.f32 %v490, 1.0
        %v493 = vrcp.pop %v491
        %v494 = vrcp.pop %v492
        %v495 = vmul.f32 %v491, %v493
        %v496 = vmul.f32 %v492, %v494
        %v497 = vsub.f32 2.0, %v495
        %v498 = vsub.f32 2.0, %v496
        %v499 = vmul.f32 %v493, %v497
        %v500 = vmul.f32 %v494, %v498
        %v501 = vmul.f32 %v499, 1.0614054
        %v502 = vmul.f32 %v500, 1.0614054
        %v503 = vadd.f32 %v501, -1.4531521
        %v504 = vadd.f32 %v502, -1.4531521
        %v505 = vmul.f32 %v503, %v499
        %v506 = vmul.f32 %v504, %v500
        %v507 = vadd.f32 %v505, 1.4214138
        %v508 = vadd.f32 %v506, 1.4214138
        %v509 = vmul.f32 %v507, %v499
        %v510 = vmul.f32 %v508, %v500
        %v511 = vadd.f32 %v509, -0.28449672
        %v512 = vadd.f32 %v510, -0.28449672
        %v513 = vmul.f32 %v511, %v499
        %v514 = vmul.f32 %v512, %v500
        %v515 = vadd.f32 %v513, 0.2548296
        %v516 = vadd.f32 %v514, 0.2548296
        %v517 = vmul.f32 %v515, %v499
        %v518 = vmul.f32 %v516, %v500
        %v519 = vsub.f32 0.0, %v483
        %v520 = vsub.f32 0.0, %v484
        %v521 = vmul.f32 %v519, %v483
        %v522 = vmul.f32 %v520, %v484
        %v523 = vmul.f32 %v521, 1.442695
        %v524 = vpow.pop %v523
        %v525 = vmul.f32 %v522, 1.442695
        %v526 = vpow.pop %v525
        %v527 = vmul.f32 %v517, %v524
        %v528 = vmul.f32 %v518, %v526
        %v529 = vsub.f32 1.0, %v527
        %v530 = vsub.f32 1.0, %v528
        %v531 = vmul.f32 %v487, %v529
        %v532 = vmul.f32 %v488, %v530
        %v533 = vmul.f32 %v479, 0.5
        %v534 = vmul.f32 %v480, 0.5
        %v535 = vadd.f32 %v531, 1.0
        %v536 = vadd.f32 %v532, 1.0
        %v537 = vmul.f32 %v533, %v535
        %v538 = vmul.f32 %v534, %v536
        %539 = vst [vmem:[%s213] sm:$0xff] %v537
        %540 = vst [vmem:[%s213 + $0x8] sm:$0xff] %v538
        %s541 = sand.u32 %s119, 1
        %s542 = scalar_lea.sflag [#allocation3], %s541
        %s543 = sand.u32 %s119, 1
        %s544 = smul.addr %s543, 16
        %s545 = scalar_lea.vmem [#allocation2], %s544
        // Predicated region
        $region33: #{tpu_custom_call.1} parent=31 // pred_check
          %p546 = pneg %p129
        $region34: #{tpu_custom_call.1} parent=31 // pred_check_branch
          %548 = sbr.rel (%p546) target = $region36
        $region35: #{tpu_custom_call.1} parent=31 // pred_region
          %s550 = ssub.s32 256, 256
          %551 = vsyncadd %s542, %s550
          %s552 = smul.addr %s21, 2
          %s553 = smul.addr %s22, 2
          %s554 = sadd.s32 %s552, %s553
          %s555 = smul.addr %s554, 128
          %s556 = scalar_lea.hbm %s3, %s555
          %s558 = sshll.u32 %s545, 4
          %s559 = int_to_ptr.vmem [resolvable:$true] %s558
          %561 = dma.vmem_to_hbm [thread:$0]  %s559, 256, %s556, %s542
        $region36: #{tpu_custom_call.1} parent=31 // pred_fallthru
          _
      $region32: #{tpu_custom_call.1} parent=5 // pred_fallthru
        _
      %p562 = scmp.le.s32.totalorder 2, %s12
      // Predicated region
      $region37: #{tpu_custom_call.1} parent=5 // pred_check
        %p563 = pneg %p562
      $region38: #{tpu_custom_call.1} parent=5 // pred_check_branch
        %565 = sbr.rel (%p563) target = $region40
      $region39: #{tpu_custom_call.1} parent=5 // pred_region
        %s566 = ssub.s32 %s12, 2
        // Predicated region
        $region41: #{tpu_custom_call.1} parent=39 // pred_check
          %p567 = pneg %p135
        $region42: #{tpu_custom_call.1} parent=39 // pred_check_branch
          %569 = sbr.rel (%p567) target = $region44
        $region43: #{tpu_custom_call.1} parent=39 // pred_region
          %s570 = sand.u32 %s120, 1
          %s571 = scalar_lea.sflag [#allocation3], %s570
          %s572 = sand.u32 %s120, 1
          %s573 = smul.addr %s572, 16
          %s574 = scalar_lea.vmem [#allocation2], %s573
          %575 = dma.done %s571, 256
        $region44: #{tpu_custom_call.1} parent=39 // pred_fallthru
          _
      $region40: #{tpu_custom_call.1} parent=5 // pred_fallthru
        _
    $region6: #{tpu_custom_call.1} parent=1 // loop_footer
      %s16 = sadd.s32 1, %s12
    $region7: #{tpu_custom_call.1} parent=1 // loop_footer_branch
      %11 = sbr.rel target = $region3
    $region8: #{tpu_custom_call.1} parent=1 // loop_exit
      _
    %576 = vsyncpa [#allocation3], 1
    %s577 = scalar_lea.sflag [#allocation3], 1
    %578 = vsyncpa %s577, 1

</llo_original>
